<compile_context>
chip_gen: v7x
topology: tpu7x:2x2x1
jax: 0.10.0
libtpu: 0.0.40
codegen_flags: <defaults>
</compile_context>

<pallas_src>
import functools

import jax
import jax.numpy as jnp
from jax.experimental import pallas as pl
from jax.experimental.pallas import tpu as pltpu


def _round_up(x, m):
    return ((x + m - 1) // m) * m


def _largest_div_tile(total, cap):
    """Largest multiple of 128 that divides `total` (itself a multiple of 128)
    and does not exceed `cap`."""
    best = 128
    cap = max(cap, 128)
    t = 128
    while t <= min(total, cap):
        if total % t == 0:
            best = t
        t += 128
    return best


def _choose_tiles(B, Hp, Cp):
    """Pick (tm, tn, tk, Mp) for the padded problem (Hp, Cp multiples of 128)."""
    # M tile: one tile over the whole (modest) batch so the weight matrix is
    # streamed from HBM exactly once (the kernel is W-bandwidth bound for
    # classifier shapes).  >= 16 rows so bf16 LHS vregs are fully packed.
    if B <= 512:
        tm = max(16, _round_up(B, 16))
    else:
        tm = 256
    Mp = _round_up(B, tm)

    # K tile: as large as possible (<= 1024) while dividing Hp exactly.
    tk = _largest_div_tile(Hp, 1024)

    # N tile: large (<= 1024); if M has only one block, cap at Cp // 2 so a
    # parallel grid axis has >= 2 iterations and both v7x TCs get work.
    cap_n = 1024
    if (Mp // tm) < 2 and Cp >= 256:
        cap_n = min(cap_n, Cp // 2)
    tn = _largest_div_tile(Cp, cap_n)
    return tm, tn, tk, Mp


def _linear_kernel(x_ref, w_ref, b_ref, o_ref):
    """One (tm, tn) f32 output tile; K (grid axis 2) is innermost.

    The output tile is resident in VMEM across the entire K loop (its block
    index does not depend on k), so it doubles as the f32 accumulator.
    """
    k = pl.program_id(2)

    # In-kernel f32 -> bf16 cast of the activations; bf16 x bf16 -> f32 MXU.
    partial = jnp.dot(
        x_ref[...].astype(jnp.bfloat16), w_ref[...],
        preferred_element_type=jnp.float32)

    @pl.when(k == 0)
    def _():
        # Fold the bias into the first K step: one fewer read-modify-write
        # pass over the output tile.
        o_ref[...] = partial + b_ref[...]

    @pl.when(k > 0)
    def _():
        o_ref[...] += partial


@functools.partial(jax.jit, static_argnames=("num_classes",))
def linear_scores_pallas(x, w_padded, b_padded, *, num_classes):
    """scores = x @ W + b as a tiled Pallas TPU kernel.

    x:        (B, H)   float32 activations
    w_padded: (Hp, Cp) bfloat16 weight, H/C zero-padded to multiples of 128
    b_padded: (1, Cp)  float32 bias, zero-padded to a multiple of 128
    Returns:  (B, num_classes) float32 scores.
    """
    B, H = x.shape
    Hp, Cp = w_padded.shape
    assert Hp % 128 == 0 and Cp % 128 == 0 and Hp >= H

    tm, tn, tk, Mp = _choose_tiles(B, Hp, Cp)

    # Zero-pad activations along M and (critically) along K so every block is
    # fully in-bounds — partial K blocks would read undefined data.  Under jit
    # this is a single fused pad (and a no-op when shapes already line up);
    # the dtype stays f32, the bf16 cast happens inside the kernel.
    if (Mp, Hp) != (B, H):
        x = jnp.zeros((Mp, Hp), x.dtype).at[:B, :H].set(x)

    grid = (Mp // tm, Cp // tn, Hp // tk)

    flops = 2 * Mp * Hp * Cp
    bytes_accessed = (Mp * Hp * 4) + (Hp * Cp * 2) + (Mp * Cp * 4) + (Cp * 4)

    out_padded = pl.pallas_call(
        _linear_kernel,
        out_shape=jax.ShapeDtypeStruct((Mp, Cp), jnp.float32),
        grid_spec=pltpu.PrefetchScalarGridSpec(
            num_scalar_prefetch=0,
            grid=grid,
            in_specs=[
                pl.BlockSpec((tm, tk), lambda i, j, k: (i, k)),   # x   (f32)
                pl.BlockSpec((tk, tn), lambda i, j, k: (k, j)),   # W   (bf16)
                pl.BlockSpec((1, tn), lambda i, j, k: (0, j)),    # bias (f32)
            ],
            # Same (i, j) block for every k -> output tile stays resident in
            # VMEM for the whole K loop and serves as the accumulator.
            out_specs=pl.BlockSpec((tm, tn), lambda i, j, k: (i, j)),
        ),
        compiler_params=pltpu.CompilerParams(
            # M, N shard across v7x's two TensorCores; K is the reduction.
            dimension_semantics=("parallel", "parallel", "arbitrary"),
            # <= 48 MiB: inside v7x's 64 MiB physical VMEM; the double-
            # buffered footprint of these tiles is ~4-14 MiB.
            vmem_limit_bytes=48 * 1024 * 1024,
        ),
        cost_estimate=pl.CostEstimate(
            flops=flops, transcendentals=0, bytes_accessed=bytes_accessed),
    )(x, w_padded, b_padded)

    # Slice the zero-padded rows/lanes back off (fused under jit).
    return out_padded[:B, :num_classes]


class BaseModelPallas:
    """JAX/Pallas analogue of mmf BaseModel's __call__/forward contract."""

    def __init__(self, config):
        self.config = dict(config)
        self._is_pretrained = False
        self._logged_warning = {"losses_present": False}

        H = self.config["hidden_size"]
        C = self.config["num_classes"]
        self.hidden_size = H
        self.num_classes = C

        # Deterministic synthetic parameters (no checkpoint loading).
        kw, kb = jax.random.split(jax.random.PRNGKey(42))
        self.weight = jax.random.normal(kw, (H, C), jnp.float32) * 0.02
        self.bias = jax.random.normal(kb, (C,), jnp.float32) * 0.01

        # Precompute lane-dense padded parameters ONCE (hoisted out of the
        # per-call path): bf16 weight padded to (ceil128(H), ceil128(C)),
        # f32 bias as a padded (1, Cp) row.
        Hp = _round_up(H, 128)
        Cp = _round_up(C, 128)
        self._w_padded = (
            jnp.zeros((Hp, Cp), jnp.bfloat16)
            .at[:H, :C].set(self.weight.astype(jnp.bfloat16))
        )
        self._b_padded = (
            jnp.zeros((1, Cp), jnp.float32)
            .at[:, :C].set(self.bias.reshape(1, C))
        )

    @property
    def is_pretrained(self):
        return self._is_pretrained

    @is_pretrained.setter
    def is_pretrained(self, x):
        self._is_pretrained = x

    def forward(self, sample_list):
        scores = linear_scores_pallas(
            sample_list["features"], self._w_padded, self._b_padded,
            num_classes=self.num_classes)
        return {"scores": scores}

    def __call__(self, sample_list):
        model_output = self.forward(sample_list)
        if self.is_pretrained:
            return model_output
        assert isinstance(model_output, dict), \
            "A dict must be returned from the forward of the model."
        if "losses" in model_output:
            assert isinstance(model_output["losses"], dict), \
                "'losses' must be a dict."
        else:
            # config has no 'losses' -> MMF's Losses([]) yields an empty dict.
            model_output["losses"] = {}
        return model_output


if __name__ == "__main__":
    # Small shapes: batch=8, hidden=32, num_classes=16
    B, H, C = 8, 32, 16
    config = {"hidden_size": H, "num_classes": C, "losses": []}

    key = jax.random.PRNGKey(0)
    features = jax.random.normal(key, (B, H), jnp.float32)
    sample_list = {"features": features}

    model = BaseModelPallas(config)
    out = model(sample_list)
    scores = jax.block_until_ready(out["scores"])

    # Sanity check against plain JAX f32 reference (kernel uses bf16 operands
    # with f32 accumulation, so allow bf16-level tolerance).
    ref = features @ model.weight + model.bias
    assert scores.shape == (B, C)
    assert jnp.allclose(scores, ref, atol=2e-2, rtol=2e-2), \
        "mismatch vs reference"
    assert out["losses"] == {}

    print("KERNEL_OK")
</pallas_src>

<mosaic_0001>
module attributes {stable_mosaic.version = 11 : i64} {
  func.func @_linear_kernel(%arg0: i32, %arg1: i32, %arg2: i32, %arg3: memref<16x128xf32, #tpu.memory_space<vmem>>, %arg4: memref<128x128xbf16, #tpu.memory_space<vmem>>, %arg5: memref<1x128xf32, #tpu.memory_space<vmem>>, %arg6: memref<16x128xf32, #tpu.memory_space<vmem>>) attributes {dimension_semantics = [#tpu.dimension_semantics<parallel>, #tpu.dimension_semantics<parallel>, #tpu.dimension_semantics<arbitrary>], iteration_bounds = array<i64: 1, 1, 1>, scalar_prefetch = 0 : i64, scratch_operands = 0 : i64, tpu.core_type = #tpu.core_type<tc>, window_params = [{transform_indices = @transform_0, window_bounds = array<i64: 16, 128>}, {transform_indices = @transform_1, window_bounds = array<i64: 128, 128>}, {transform_indices = @transform_2, window_bounds = array<i64: 1, 128>}, {transform_indices = @transform_3, window_bounds = array<i64: 16, 128>}]} {
    %c0 = arith.constant 0 : index
    %c0_0 = arith.constant 0 : index
    %0 = vector.load %arg3[%c0, %c0_0] : memref<16x128xf32, #tpu.memory_space<vmem>>, vector<16x128xf32>
    %1 = arith.truncf %0 : vector<16x128xf32> to vector<16x128xbf16>
    %c0_1 = arith.constant 0 : index
    %c0_2 = arith.constant 0 : index
    %2 = vector.load %arg4[%c0_1, %c0_2] : memref<128x128xbf16, #tpu.memory_space<vmem>>, vector<128x128xbf16>
    %cst = arith.constant dense<0.000000e+00> : vector<16x128xf32>
    %3 = tpu.matmul %1, %2, %cst {dimension_numbers = #tpu.dot_dimension_numbers<[1], [0], [0], [1], [0, 0, 1, 1], [], []>} : vector<16x128xbf16>, vector<128x128xbf16>, vector<16x128xf32> -> vector<16x128xf32>
    %c0_i32 = arith.constant 0 : i32
    %4 = arith.cmpi eq, %arg2, %c0_i32 : i32
    %5 = arith.extui %4 : i1 to i32
    %c0_i32_3 = arith.constant 0 : i32
    %6 = arith.cmpi ne, %5, %c0_i32_3 : i32
    scf.if %6 {
      %c0_6 = arith.constant 0 : index
      %c0_7 = arith.constant 0 : index
      %10 = vector.load %arg5[%c0_6, %c0_7] : memref<1x128xf32, #tpu.memory_space<vmem>>, vector<1x128xf32>
      %11 = vector.broadcast %10 : vector<1x128xf32> to vector<16x128xf32>
      %12 = arith.addf %3, %11 : vector<16x128xf32>
      %c0_8 = arith.constant 0 : index
      %c0_9 = arith.constant 0 : index
      %13 = vector.load %arg6[%c0_8, %c0_9] : memref<16x128xf32, #tpu.memory_space<vmem>>, vector<16x128xf32>
      tpu.vector_store %arg6[%c0_8, %c0_9], %12 {strides = array<i32>} : memref<16x128xf32, #tpu.memory_space<vmem>>, vector<16x128xf32>,
    } else {
    }
    %c0_i32_4 = arith.constant 0 : i32
    %7 = arith.cmpi sgt, %arg2, %c0_i32_4 : i32
    %8 = arith.extui %7 : i1 to i32
    %c0_i32_5 = arith.constant 0 : i32
    %9 = arith.cmpi ne, %8, %c0_i32_5 : i32
    scf.if %9 {
      %c0_6 = arith.constant 0 : index
      %c0_7 = arith.constant 0 : index
      %10 = vector.load %arg6[%c0_6, %c0_7] : memref<16x128xf32, #tpu.memory_space<vmem>>, vector<16x128xf32>
      %11 = arith.addf %10, %3 : vector<16x128xf32>
      %c0_8 = arith.constant 0 : index
      %c0_9 = arith.constant 0 : index
      %12 = vector.load %arg6[%c0_8, %c0_9] : memref<16x128xf32, #tpu.memory_space<vmem>>, vector<16x128xf32>
      tpu.vector_store %arg6[%c0_8, %c0_9], %11 {strides = array<i32>} : memref<16x128xf32, #tpu.memory_space<vmem>>, vector<16x128xf32>,
    } else {
    }
    return
  }
  func.func @transform_0(%arg0: i32, %arg1: i32, %arg2: i32) -> (i32, i32) {
    %c0_i32 = arith.constant 0 : i32
    return %arg0, %arg2 : i32, i32
  }
  func.func @transform_1(%arg0: i32, %arg1: i32, %arg2: i32) -> (i32, i32) {
    %c0_i32 = arith.constant 0 : i32
    return %arg2, %arg1 : i32, i32
  }
  func.func @transform_2(%arg0: i32, %arg1: i32, %arg2: i32) -> (i32, i32) {
    %c0_i32 = arith.constant 0 : i32
    %c0_i32_0 = arith.constant 0 : i32
    return %c0_i32, %arg1 : i32, i32
  }
  func.func @transform_3(%arg0: i32, %arg1: i32, %arg2: i32) -> (i32, i32) {
    %c0_i32 = arith.constant 0 : i32
    return %arg0, %arg1 : i32, i32
  }
}

</mosaic_0001>

<llo_original>
// kernel: linear_scores_pallas.1
$region0: #{linear_scores_pallas.1}
  #allocation0 [shape = 'u32[]', space=smem, size = 0x4, offset = 0x4, fixed_abs, tag = 'smem constant byte address 0x4 - core index']
  #allocation1 [shape = 'u32[144,128]{1,0:T(1,128)}', space=vmem, size = 0x12000, scoped, tag = 'internal scratch']
  %s0 = inlined_call_operand.vmem [shape: f32[16,128], index: 0, kind: input, shape index: {}]
  %s1 = inlined_call_operand.hbm [shape: bf16[128,128], index: 1, kind: input, shape index: {}]
  %s2 = inlined_call_operand.vmem [shape: f32[1,128], index: 2, kind: input, shape index: {}]
  %s3 = inlined_call_operand.vmem [shape: f32[16,128], index: 3, kind: output, shape index: {}]
  %s4 = sld [smem:[#allocation0]]
  $region34: #{linear_scores_pallas.1} parent=0
    _
  %s6 = ssub.s32 1, %s4
  %s7 = scalar_select 0, %s6, %s4
  $region1: #{linear_scores_pallas.1} parent=0
    #allocation2 [shape = 'u8[32768]{0}', space=vmem, size = 0x8000, scoped, tag = 'input window, operand 1, single buffered']
    #allocation3 [shape = 's32[1]{0}', space=sflag, size = 0x4, scoped, tag = 'scoped memory for linear_scores_pallas.1']
    %8 = vsyncpa [#allocation3], 0
    // Predicated region
    $region2: #{linear_scores_pallas.1} parent=1 // pred_check
      _
    $region3: #{linear_scores_pallas.1} parent=1 // pred_check_branch
      %10 = sbr.rel (0) target = $region5
    $region4: #{linear_scores_pallas.1} parent=1 // pred_region
      _
    $region5: #{linear_scores_pallas.1} parent=1 // pred_fallthru
      _
    // Predicated region
    $region6: #{linear_scores_pallas.1} parent=1 // pred_check
      _
    $region7: #{linear_scores_pallas.1} parent=1 // pred_check_branch
      %12 = sbr.rel (0) target = $region9
    $region8: #{linear_scores_pallas.1} parent=1 // pred_region
      %s14 = ssub.s32 1024, 1024
      %15 = vsyncadd [#allocation3], %s14
      %s16 = sshll.u32 [#allocation2], 4
      %s17 = int_to_ptr.vmem [resolvable:$true] %s16
      %22 = dma.hbm_to_vmem [thread:$0]  %s1, 1024, %s17, [#allocation3], 64, 64, 4
    $region9: #{linear_scores_pallas.1} parent=1 // pred_fallthru
      _
    // Predicated region
    $region10: #{linear_scores_pallas.1} parent=1 // pred_check
      _
    $region11: #{linear_scores_pallas.1} parent=1 // pred_check_branch
      %24 = sbr.rel (0) target = $region13
    $region12: #{linear_scores_pallas.1} parent=1 // pred_region
      _
    $region13: #{linear_scores_pallas.1} parent=1 // pred_fallthru
      _
    // Predicated region
    $region14: #{linear_scores_pallas.1} parent=1 // pred_check
      _
    $region15: #{linear_scores_pallas.1} parent=1 // pred_check_branch
      %26 = sbr.rel (0) target = $region17
    $region16: #{linear_scores_pallas.1} parent=1 // pred_region
      %27 = dma.done [#allocation3], 1024
    $region17: #{linear_scores_pallas.1} parent=1 // pred_fallthru
      _
    %v29 = vld [vmem:[%s0] sm:$0xff]
    %v30 = vld [vmem:[%s0 + $0x8] sm:$0xff]
    %v31 = vpack.c.bf16 %v30, %v29
    %v32 = vld [vmem:[#allocation2] sm:$0xf]
    %v33 = vld [vmem:[#allocation2 + $0x4] sm:$0xf]
    %v34 = vld [vmem:[#allocation2 + $0x8] sm:$0xf]
    %v35 = vld [vmem:[#allocation2 + $0xc] sm:$0xf]
    %v36 = vld [vmem:[#allocation2 + $0x10] sm:$0xf]
    %v37 = vld [vmem:[#allocation2 + $0x14] sm:$0xf]
    %v38 = vld [vmem:[#allocation2 + $0x18] sm:$0xf]
    %v39 = vld [vmem:[#allocation2 + $0x1c] sm:$0xf]
    %v40 = vld [vmem:[#allocation2 + $0x20] sm:$0xf]
    %v41 = vld [vmem:[#allocation2 + $0x24] sm:$0xf]
    %v42 = vld [vmem:[#allocation2 + $0x28] sm:$0xf]
    %v43 = vld [vmem:[#allocation2 + $0x2c] sm:$0xf]
    %v44 = vld [vmem:[#allocation2 + $0x30] sm:$0xf]
    %v45 = vld [vmem:[#allocation2 + $0x34] sm:$0xf]
    %v46 = vld [vmem:[#allocation2 + $0x38] sm:$0xf]
    %v47 = vld [vmem:[#allocation2 + $0x3c] sm:$0xf]
    %v64 = vunpack.c.l.b16 %v32
    %v65 = vunpack.c.l.b16 %v33
    %v66 = vunpack.c.l.b16 %v34
    %v67 = vunpack.c.l.b16 %v35
    %v68 = vunpack.c.l.b16 %v36
    %v69 = vunpack.c.l.b16 %v37
    %v70 = vunpack.c.l.b16 %v38
    %v71 = vunpack.c.l.b16 %v39
    %v72 = vunpack.c.l.b16 %v40
    %v73 = vunpack.c.l.b16 %v41
    %v74 = vunpack.c.l.b16 %v42
    %v75 = vunpack.c.l.b16 %v43
    %v76 = vunpack.c.l.b16 %v44
    %v77 = vunpack.c.l.b16 %v45
    %v78 = vunpack.c.l.b16 %v46
    %v79 = vunpack.c.l.b16 %v47
    %v80 = vpack.c.b16 %v65, %v64
    %v81 = vpack.c.b16 %v67, %v66
    %v82 = vpack.c.b16 %v69, %v68
    %v83 = vpack.c.b16 %v71, %v70
    %v84 = vpack.c.b16 %v73, %v72
    %v85 = vpack.c.b16 %v75, %v74
    %v86 = vpack.c.b16 %v77, %v76
    %v87 = vpack.c.b16 %v79, %v78
    %96 = vmatprep.subr.bf16.mxu0 0
    %97 = vmatpush1.bf16.msra.mxu0 %v80
    %98 = vmatprep.subr.bf16.mxu0 0
    %99 = vmatpush1.bf16.msra.mxu0 %v81
    %100 = vmatprep.subr.bf16.mxu0 0
    %101 = vmatpush1.bf16.msra.mxu0 %v82
    %102 = vmatprep.subr.bf16.mxu0 0
    %103 = vmatpush1.bf16.msra.mxu0 %v83
    %104 = vmatprep.subr.bf16.mxu0 0
    %105 = vmatpush1.bf16.msra.mxu0 %v84
    %106 = vmatprep.subr.bf16.mxu0 0
    %107 = vmatpush1.bf16.msra.mxu0 %v85
    %108 = vmatprep.subr.bf16.mxu0 0
    %109 = vmatpush1.bf16.msra.mxu0 %v86
    %110 = vmatprep.subr.bf16.mxu0 0
    %111 = vmatpush1.bf16.msra.mxu0 %v87
    %112 = vmatprep.subr.bf16.mxu0 0
    %113 = vmatpush1.bf16.msra.mxu0 0
    %114 = vmatprep.subr.bf16.mxu0 0
    %115 = vmatpush1.bf16.msra.mxu0 0
    %116 = vmatprep.subr.bf16.mxu0 0
    %117 = vmatpush1.bf16.msra.mxu0 0
    %118 = vmatprep.subr.bf16.mxu0 0
    %119 = vmatpush1.bf16.msra.mxu0 0
    %120 = vmatprep.subr.bf16.mxu0 0
    %121 = vmatpush1.bf16.msra.mxu0 0
    %122 = vmatprep.subr.bf16.mxu0 0
    %123 = vmatpush1.bf16.msra.mxu0 0
    %124 = vmatprep.subr.bf16.mxu0 0
    %125 = vmatpush1.bf16.msra.mxu0 0
    %126 = vmatprep.subr.bf16.mxu0 0
    %127 = vmatpush1.bf16.msra.mxu0 0
    %128 = vmatprep.mubr.bf16.mxu0 0
    %129 = vmatmul.mubr.bf16.gmra.mrb[0].mxu0 %v31
    %v130 = vpop.f32.mrb[0].mxu0
    %v131 = vadd.f32 0.0, %v130
    %v132 = vpop.f32.mrb[0].mxu0
    %v133 = vpop.f32.mrb[0].mxu0
    %v134 = vadd.f32 0.0, %v133
    %v135 = vpop.f32.mrb[0].mxu0
    %136 = vdwg.mxu0
    %p137 = scmp.eq.s32.totalorder 0, 0
    // Predicated region
    $region18: #{linear_scores_pallas.1} parent=1 // pred_check
      %p138 = pneg %p137
    $region19: #{linear_scores_pallas.1} parent=1 // pred_check_branch
      %140 = sbr.rel (%p138) target = $region21
    $region20: #{linear_scores_pallas.1} parent=1 // pred_region
      %v141 = vld [vmem:[%s2] sm:$0x1]
      %v143 = vlaneseq
      %v144 = vshrl.u32 %v143, 7
      %v145 = vsub.s32 0, %v144
      %v146 = vrot.slane %v141, %v145
      %v148 = vadd.f32 %v131, %v146
      %v149 = vadd.f32 %v134, %v146
      %150 = vst [vmem:[%s3] sm:$0xff] %v148
      %151 = vst [vmem:[%s3 + $0x8] sm:$0xff] %v149
    $region21: #{linear_scores_pallas.1} parent=1 // pred_fallthru
      _
    %p152 = scmp.gt.s32.totalorder 0, 0
    // Predicated region
    $region22: #{linear_scores_pallas.1} parent=1 // pred_check
      %p153 = pneg %p152
    $region23: #{linear_scores_pallas.1} parent=1 // pred_check_branch
      %155 = sbr.rel (%p153) target = $region25
    $region24: #{linear_scores_pallas.1} parent=1 // pred_region
      %v156 = vld [vmem:[%s3] sm:$0xff]
      %v157 = vld [vmem:[%s3 + $0x8] sm:$0xff]
      %v158 = vadd.f32 %v156, %v131
      %v159 = vadd.f32 %v157, %v134
      %160 = vst [vmem:[%s3] sm:$0xff] %v158
      %161 = vst [vmem:[%s3 + $0x8] sm:$0xff] %v159
    $region25: #{linear_scores_pallas.1} parent=1 // pred_fallthru
      _
    // Predicated region
    $region26: #{linear_scores_pallas.1} parent=1 // pred_check
      _
    $region27: #{linear_scores_pallas.1} parent=1 // pred_check_branch
      %163 = sbr.rel (0) target = $region29
    $region28: #{linear_scores_pallas.1} parent=1 // pred_region
      _
    $region29: #{linear_scores_pallas.1} parent=1 // pred_fallthru
      _
    // Predicated region
    $region30: #{linear_scores_pallas.1} parent=1 // pred_check
      _
    $region31: #{linear_scores_pallas.1} parent=1 // pred_check_branch
      %165 = sbr.rel (0) target = $region33
    $region32: #{linear_scores_pallas.1} parent=1 // pred_region
      _
    $region33: #{linear_scores_pallas.1} parent=1 // pred_fallthru
      _
    %166 = vsyncpa [#allocation3], 1

</llo_original>
